<compile_context>
chip_gen: v6e
topology: v6e:2x2x1
jax: 0.10.0
libtpu: 0.0.40
codegen_flags: <defaults>
</compile_context>

<pallas_src>
import jax
import jax.numpy as jnp
from jax.experimental import pallas as pl
from jax.experimental.pallas import tpu as pltpu


def _round_up(x, m):
    return ((x + m - 1) // m) * m


def qa_fused_kernel(tok_ref, mask_ref, tw_ref, b_ref, o_ref):
    """Fused masked-pool + (folded) Linear(H, 1) for one batch tile.

    tok_ref:  (TB, S, 1) int32  token ids                     (VMEM)
    mask_ref: (TB, S, 1) f32    padding mask (1/0)            (VMEM)
    tw_ref:   (1, V)     f32    folded table: table @ w^T     (VMEM, resident)
    b_ref:    (1,)       f32    Linear(H, 1).bias             (SMEM scalar)
    o_ref:    (TB, 1)    f32    logits for this tile          (VMEM)
    """
    tok = tok_ref[...]                                  # (TB, S, 1) int32
    m = mask_ref[...]                                   # (TB, S, 1) f32
    v = tw_ref.shape[1]

    # Vocab ids as a single lane-iota vreg (1, 1, V); the compare broadcasts it
    # against the (TB, S, 1) tokens (lane-splat), no (TB, S, V) iota is built.
    vids = jax.lax.broadcasted_iota(jnp.int32, (1, 1, v), 2)

    # Masked one-hot counts: wm[b, v] = sum_s mask[b, s] * [tok[b, s] == v].
    # S sits on sublanes, V on lanes -> sublane reduction only; f32 throughout.
    wm = jnp.sum(jnp.where(tok == vids, m, 0.0), axis=1)        # (TB, V) f32

    # Folded Linear(H, 1):  logits[b] = sum_v wm[b, v] * tw[v] + bias.
    # VPU multiply + lane (XLU) reduction; no MXU work in this kernel.
    logits = jnp.sum(wm * tw_ref[...], axis=1, keepdims=True)   # (TB, 1) f32
    o_ref[...] = logits + b_ref[0]


def fine_tuned_qa_forward(inputs, mask, embed_table, lin_w, lin_b, *, tile_b=None):
    """FineTunedQA.forward: (fused) encoder lookup -> masked sum -> Linear(H, 1)."""
    B, S = inputs.shape
    V, H = embed_table.shape

    # Fold Linear(H, 1) into the embedding table (exact by linearity):
    #   logits[b] = sum_s mask[b, s] * (table[tok[b, s]] . w) + bias
    # so the kernel only needs the (V,) folded vector, never the (V, H) table.
    w_col = jnp.asarray(lin_w).reshape(H, 1).astype(jnp.float32)
    tw_row = (embed_table.astype(jnp.float32) @ w_col).reshape(1, V)     # (1, V)
    bias = jnp.asarray(lin_b).reshape(1).astype(jnp.float32)

    # Batch tiling: a single grid step for tiny B (padded to a multiple of 8);
    # 128-row tiles at realistic B, giving multiple "parallel" steps that the
    # v7x megacore shards across its two TensorCores.
    if tile_b is None:
        tile_b = min(_round_up(B, 8), 128)
    tile_b = _round_up(tile_b, 8)
    nt = pl.cdiv(B, tile_b)
    b_pad = nt * tile_b

    # Padded rows carry mask == 0; their logits equal the bias and are sliced
    # off below (never returned to the caller).
    tok = jnp.pad(inputs.astype(jnp.int32), ((0, b_pad - B), (0, 0)))
    msk = jnp.pad(mask.astype(jnp.float32), ((0, b_pad - B), (0, 0)))
    # (B, S, 1): S on sublanes so the in-kernel compare needs no relayout.
    # TODO(synk): at large S this trailing-1 lane dim wastes VMEM; the
    # real-scale design moves tokens to SMEM (scalar prefetch) + DMA row gather.
    tok3 = tok.reshape(b_pad, S, 1)
    msk3 = msk.reshape(b_pad, S, 1)

    out = pl.pallas_call(
        qa_fused_kernel,
        out_shape=jax.ShapeDtypeStruct((b_pad, 1), jnp.float32),
        grid_spec=pltpu.PrefetchScalarGridSpec(
            num_scalar_prefetch=0,
            grid=(nt,),
            in_specs=[
                pl.BlockSpec((tile_b, S, 1), lambda i: (i, 0, 0)),   # token ids
                pl.BlockSpec((tile_b, S, 1), lambda i: (i, 0, 0)),   # mask
                pl.BlockSpec((1, V), lambda i: (0, 0)),              # folded table (resident)
                pl.BlockSpec(memory_space=pltpu.MemorySpace.SMEM),   # bias scalar
            ],
            out_specs=pl.BlockSpec((tile_b, 1), lambda i: (i, 0)),
        ),
        compiler_params=pltpu.CompilerParams(
            # Batch tiles are independent -> shard across v7x's two TCs.
            dimension_semantics=("parallel",),
            # KiB-scale footprint here; re-derive per chip (64 MiB physical on
            # v7x vs 128 MiB on v5e/v6e) once tile_b / S grow.
            vmem_limit_bytes=32 * 1024 * 1024,
        ),
    )(tok3, msk3, tw_row, bias)

    return out[:B]                                    # (B, 1)


if __name__ == "__main__":
    # Small shapes consistent with the module:
    #   batch = 2 questions, num_potential_answers = 3  ->  B = 6 rows
    #   seq len S = 8, encoder_hid_dim H = 128, vocab = 64
    batch, num_candidates = 2, 3
    B = batch * num_candidates
    S, H, vocab = 8, 128, 64

    key = jax.random.PRNGKey(0)
    k_emb, k_w, k_b, k_tok, k_len = jax.random.split(key, 5)

    # Model parameters stored in bf16 (the fold happens in f32); bias in f32.
    embed_table = (jax.random.normal(k_emb, (vocab, H), jnp.float32) * 0.1
                   ).astype(jnp.bfloat16)
    lin_w = (jax.random.normal(k_w, (1, H), jnp.float32) * 0.05
             ).astype(jnp.bfloat16)                         # nn.Linear(H, 1).weight
    lin_b = jax.random.normal(k_b, (1,), jnp.float32) * 0.05     # nn.Linear(H, 1).bias

    # Deterministic example inputs: token ids + padding mask.
    inputs = jax.random.randint(k_tok, (B, S), 0, vocab, dtype=jnp.int32)
    lengths = jax.random.randint(k_len, (B,), 3, S + 1, dtype=jnp.int32)
    mask = (jnp.arange(S)[None, :] < lengths[:, None]).astype(jnp.float32)

    logits = fine_tuned_qa_forward(inputs, mask, embed_table, lin_w, lin_b)
    logits = jax.block_until_ready(logits)

    # Plain-JAX reference of the same math (lookup -> mask -> sum -> Linear).
    hidden = embed_table.astype(jnp.float32)[inputs]                 # (B, S, H)
    sent_ref = jnp.sum(hidden * mask[:, :, None], axis=1)            # (B, H)
    ref = sent_ref @ lin_w.astype(jnp.float32).T + lin_b             # (B, 1)

    assert logits.shape == (B, 1)
    assert jnp.allclose(logits, ref, atol=1e-4, rtol=1e-4)

    print("KERNEL_OK")
</pallas_src>

<mosaic_0001>
module attributes {stable_mosaic.version = 11 : i64} {
  func.func @qa_fused_kernel(%arg0: i32, %arg1: memref<8x8x1xi32, #tpu.memory_space<vmem>>, %arg2: memref<8x8x1xf32, #tpu.memory_space<vmem>>, %arg3: memref<1x64xf32, #tpu.memory_space<vmem>>, %arg4: memref<1xf32, #tpu.memory_space<smem>>, %arg5: memref<8x1xf32, #tpu.memory_space<vmem>>) attributes {dimension_semantics = [#tpu.dimension_semantics<parallel>], iteration_bounds = array<i64: 1>, scalar_prefetch = 0 : i64, scratch_operands = 0 : i64, tpu.core_type = #tpu.core_type<tc>, window_params = [{transform_indices = @transform_0, window_bounds = array<i64: 8, 8, 1>}, {transform_indices = @transform_1, window_bounds = array<i64: 8, 8, 1>}, {pipeline_mode = #tpu.pipeline_mode<synchronous>, transform_indices = @transform_2, window_bounds = array<i64: 1, 64>}, {transform_indices = @transform_3, window_bounds = array<i64: 1>}, {transform_indices = @transform_4, window_bounds = array<i64: 8, 1>}]} {
    %c0 = arith.constant 0 : index
    %c0_0 = arith.constant 0 : index
    %c0_1 = arith.constant 0 : index
    %0 = vector.load %arg1[%c0, %c0_0, %c0_1] : memref<8x8x1xi32, #tpu.memory_space<vmem>>, vector<8x8x1xi32>
    %c0_2 = arith.constant 0 : index
    %c0_3 = arith.constant 0 : index
    %c0_4 = arith.constant 0 : index
    %1 = vector.load %arg2[%c0_2, %c0_3, %c0_4] : memref<8x8x1xf32, #tpu.memory_space<vmem>>, vector<8x8x1xf32>
    %2 = tpu.iota {dimensions = array<i32: 2>} : vector<1x1x64xi32>
    %3 = vector.broadcast %0 : vector<8x8x1xi32> to vector<8x8x64xi32>
    %4 = vector.broadcast %2 : vector<1x1x64xi32> to vector<8x8x64xi32>
    %5 = arith.cmpi eq, %3, %4 : vector<8x8x64xi32>
    %cst = arith.constant 0.000000e+00 : f32
    %6 = vector.shape_cast %1 : vector<8x8x1xf32> to vector<8x8x1xf32>
    %7 = vector.broadcast %6 : vector<8x8x1xf32> to vector<8x8x64xf32>
    %8 = vector.broadcast %cst : f32 to vector<8x8x64xf32>
    %9 = arith.select %5, %7, %8 : vector<8x8x64xi1>, vector<8x8x64xf32>
    %cst_5 = arith.constant dense<0.000000e+00> : vector<8x64xf32>
    %10 = vector.multi_reduction <add>, %9, %cst_5 [1] : vector<8x8x64xf32> to vector<8x64xf32>
    %c0_6 = arith.constant 0 : index
    %c0_7 = arith.constant 0 : index
    %11 = vector.load %arg3[%c0_6, %c0_7] : memref<1x64xf32, #tpu.memory_space<vmem>>, vector<1x64xf32>
    %12 = vector.broadcast %11 : vector<1x64xf32> to vector<8x64xf32>
    %13 = arith.mulf %10, %12 : vector<8x64xf32>
    %cst_8 = arith.constant dense<0.000000e+00> : vector<8xf32>
    %14 = vector.multi_reduction <add>, %13, %cst_8 [1] : vector<8x64xf32> to vector<8xf32>
    %15 = vector.shape_cast %14 : vector<8xf32> to vector<8x1xf32>
    %c0_9 = arith.constant 0 : index
    %16 = memref.load %arg4[%c0_9] : memref<1xf32, #tpu.memory_space<smem>>
    %17 = vector.broadcast %16 : f32 to vector<8x1xf32>
    %18 = arith.addf %15, %17 : vector<8x1xf32>
    %c0_10 = arith.constant 0 : index
    %c0_11 = arith.constant 0 : index
    %19 = vector.load %arg5[%c0_10, %c0_11] : memref<8x1xf32, #tpu.memory_space<vmem>>, vector<8x1xf32>
    tpu.vector_store %arg5[%c0_10, %c0_11], %18 {strides = array<i32>} : memref<8x1xf32, #tpu.memory_space<vmem>>, vector<8x1xf32>,
    return
  }
  func.func @transform_0(%arg0: i32) -> (i32, i32, i32) {
    %c0_i32 = arith.constant 0 : i32
    %c0_i32_0 = arith.constant 0 : i32
    %c0_i32_1 = arith.constant 0 : i32
    return %arg0, %c0_i32, %c0_i32_0 : i32, i32, i32
  }
  func.func @transform_1(%arg0: i32) -> (i32, i32, i32) {
    %c0_i32 = arith.constant 0 : i32
    %c0_i32_0 = arith.constant 0 : i32
    %c0_i32_1 = arith.constant 0 : i32
    return %arg0, %c0_i32, %c0_i32_0 : i32, i32, i32
  }
  func.func @transform_2(%arg0: i32) -> (i32, i32) {
    %c0_i32 = arith.constant 0 : i32
    %c0_i32_0 = arith.constant 0 : i32
    %c0_i32_1 = arith.constant 0 : i32
    return %c0_i32, %c0_i32_0 : i32, i32
  }
  func.func @transform_3(%arg0: i32) -> i32 {
    %c0_i32 = arith.constant 0 : i32
    %c0_i32_0 = arith.constant 0 : i32
    return %c0_i32 : i32
  }
  func.func @transform_4(%arg0: i32) -> (i32, i32) {
    %c0_i32 = arith.constant 0 : i32
    %c0_i32_0 = arith.constant 0 : i32
    return %arg0, %c0_i32 : i32, i32
  }
}

</mosaic_0001>

<llo_original>
// kernel: tpu_custom_call.1
$region0: #{tpu_custom_call.1}
  #allocation0 [shape = 'u32[]', space=smem, size = 0x4, offset = 0x4, fixed_abs, tag = 'smem constant byte address 0x4 - core index']
  #allocation1 [shape = 'u32[144,128]{1,0:T(1,128)}', space=vmem, size = 0x12000, scoped, tag = 'internal scratch']
  #allocation2 [shape = 'f32[1]{0:T(128)S(6)}', space=smem, size = 0x200, scoped, tag = 'scoped memory for tpu_custom_call.1']
  %s0 = inlined_call_operand.vmem [shape: s32[8,8,1], index: 0, kind: input, shape index: {}]
  %s1 = inlined_call_operand.vmem [shape: f32[8,8,1], index: 1, kind: input, shape index: {}]
  %s2 = inlined_call_operand.vmem [shape: f32[1,64], index: 2, kind: input, shape index: {}]
  %s3 = inlined_call_operand.<no memory space> [shape: f32[1], index: 3, kind: input, shape index: {}]
  %s4 = inlined_call_operand.vmem [shape: f32[8,1], index: 4, kind: output, shape index: {}]
  %s5 = sld [smem:[#allocation0]]
  $region26: #{tpu_custom_call.1} parent=0
    _
  %s7 = ssub.s32 1, %s5
  %s8 = scalar_select 0, %s7, %s5
  %9 = sst [smem:[#allocation2]] %s3
  // Predicated region
  $region2: #{tpu_custom_call.1} parent=0 // pred_check
    _
  $region3: #{tpu_custom_call.1} parent=0 // pred_check_branch
    %11 = sbr.rel (0) target = $region5
  $region4: #{tpu_custom_call.1} parent=0 // pred_region
    _
  $region5: #{tpu_custom_call.1} parent=0 // pred_fallthru
    _
  // Predicated region
  $region6: #{tpu_custom_call.1} parent=0 // pred_check
    _
  $region7: #{tpu_custom_call.1} parent=0 // pred_check_branch
    %13 = sbr.rel (0) target = $region9
  $region8: #{tpu_custom_call.1} parent=0 // pred_region
    _
  $region9: #{tpu_custom_call.1} parent=0 // pred_fallthru
    _
  // Predicated region
  $region10: #{tpu_custom_call.1} parent=0 // pred_check
    _
  $region11: #{tpu_custom_call.1} parent=0 // pred_check_branch
    %15 = sbr.rel (0) target = $region13
  $region12: #{tpu_custom_call.1} parent=0 // pred_region
    _
  $region13: #{tpu_custom_call.1} parent=0 // pred_fallthru
    _
  // Predicated region
  $region14: #{tpu_custom_call.1} parent=0 // pred_check
    _
  $region15: #{tpu_custom_call.1} parent=0 // pred_check_branch
    %17 = sbr.rel (0) target = $region17
  $region16: #{tpu_custom_call.1} parent=0 // pred_region
    _
  $region17: #{tpu_custom_call.1} parent=0 // pred_fallthru
    _
  %v18 = vld [vmem:[%s0] sm:$0xff]
  %v19 = vld [vmem:[%s0 + $0x8] sm:$0xff]
  %v20 = vld [vmem:[%s0 + $0x10] sm:$0xff]
  %v21 = vld [vmem:[%s0 + $0x18] sm:$0xff]
  %v22 = vld [vmem:[%s0 + $0x20] sm:$0xff]
  %v23 = vld [vmem:[%s0 + $0x28] sm:$0xff]
  %v24 = vld [vmem:[%s0 + $0x30] sm:$0xff]
  %v25 = vld [vmem:[%s0 + $0x38] sm:$0xff]
  %v26 = vld [vmem:[%s1] sm:$0xff]
  %v27 = vld [vmem:[%s1 + $0x8] sm:$0xff]
  %v28 = vld [vmem:[%s1 + $0x10] sm:$0xff]
  %v29 = vld [vmem:[%s1 + $0x18] sm:$0xff]
  %v30 = vld [vmem:[%s1 + $0x20] sm:$0xff]
  %v31 = vld [vmem:[%s1 + $0x28] sm:$0xff]
  %v32 = vld [vmem:[%s1 + $0x30] sm:$0xff]
  %v33 = vld [vmem:[%s1 + $0x38] sm:$0xff]
  %v34 = vlaneseq
  %v35 = vand.u32 %v34, 127
  %36 = vset.pattern.permute.xlu0 0
  %37 = vperm.xlu0 %36, %v18
  %v38 = vpop.permute.xlu0 %37
  %39 = vset.pattern.permute.xlu0 0
  %40 = vperm.xlu0 %39, %v19
  %v41 = vpop.permute.xlu0 %40
  %42 = vset.pattern.permute.xlu0 0
  %43 = vperm.xlu0 %42, %v20
  %v44 = vpop.permute.xlu0 %43
  %45 = vset.pattern.permute.xlu0 0
  %46 = vperm.xlu0 %45, %v21
  %v47 = vpop.permute.xlu0 %46
  %48 = vset.pattern.permute.xlu0 0
  %49 = vperm.xlu0 %48, %v22
  %v50 = vpop.permute.xlu0 %49
  %51 = vset.pattern.permute.xlu0 0
  %52 = vperm.xlu0 %51, %v23
  %v53 = vpop.permute.xlu0 %52
  %54 = vset.pattern.permute.xlu0 0
  %55 = vperm.xlu0 %54, %v24
  %v56 = vpop.permute.xlu0 %55
  %57 = vset.pattern.permute.xlu0 0
  %58 = vperm.xlu0 %57, %v25
  %v59 = vpop.permute.xlu0 %58
  %vm60 = vcmp.eq.s32.totalorder %v38, %v35
  %vm61 = vcmp.eq.s32.totalorder %v41, %v35
  %vm62 = vcmp.eq.s32.totalorder %v44, %v35
  %vm63 = vcmp.eq.s32.totalorder %v47, %v35
  %vm64 = vcmp.eq.s32.totalorder %v50, %v35
  %vm65 = vcmp.eq.s32.totalorder %v53, %v35
  %vm66 = vcmp.eq.s32.totalorder %v56, %v35
  %vm67 = vcmp.eq.s32.totalorder %v59, %v35
  %69 = vset.pattern.permute.xlu0 0
  %70 = vperm.xlu0 %69, %v26
  %v71 = vpop.permute.xlu0 %70
  %74 = vset.pattern.permute.xlu0 0
  %75 = vperm.xlu0 %74, %v27
  %v76 = vpop.permute.xlu0 %75
  %79 = vset.pattern.permute.xlu0 0
  %80 = vperm.xlu0 %79, %v28
  %v81 = vpop.permute.xlu0 %80
  %84 = vset.pattern.permute.xlu0 0
  %85 = vperm.xlu0 %84, %v29
  %v86 = vpop.permute.xlu0 %85
  %89 = vset.pattern.permute.xlu0 0
  %90 = vperm.xlu0 %89, %v30
  %v91 = vpop.permute.xlu0 %90
  %94 = vset.pattern.permute.xlu0 0
  %95 = vperm.xlu0 %94, %v31
  %v96 = vpop.permute.xlu0 %95
  %99 = vset.pattern.permute.xlu0 0
  %100 = vperm.xlu0 %99, %v32
  %v101 = vpop.permute.xlu0 %100
  %104 = vset.pattern.permute.xlu0 0
  %105 = vperm.xlu0 %104, %v33
  %v106 = vpop.permute.xlu0 %105
  %v108 = vsel %vm60, %v71, 0.0
  %v109 = vsel %vm61, %v76, 0.0
  %v110 = vsel %vm62, %v81, 0.0
  %v111 = vsel %vm63, %v86, 0.0
  %v112 = vsel %vm64, %v91, 0.0
  %v113 = vsel %vm65, %v96, 0.0
  %v114 = vsel %vm66, %v101, 0.0
  %v115 = vsel %vm67, %v106, 0.0
  %vm116 = vcmask 523264
  %v117 = vsel %vm116, %v108, 0.0
  %v118 = vrot.slane %v117, 4
  %v119 = vadd.f32 %v117, %v118
  %v120 = vrot.slane %v119, 2
  %v121 = vadd.f32 %v119, %v120
  %v122 = vrot.slane %v121, 1
  %v123 = vadd.f32 %v121, %v122
  %v124 = vsel %vm116, %v109, 0.0
  %v125 = vrot.slane %v124, 4
  %v126 = vadd.f32 %v124, %v125
  %v127 = vrot.slane %v126, 2
  %v128 = vadd.f32 %v126, %v127
  %v129 = vrot.slane %v128, 1
  %v130 = vadd.f32 %v128, %v129
  %v131 = vsel %vm116, %v110, 0.0
  %v132 = vrot.slane %v131, 4
  %v133 = vadd.f32 %v131, %v132
  %v134 = vrot.slane %v133, 2
  %v135 = vadd.f32 %v133, %v134
  %v136 = vrot.slane %v135, 1
  %v137 = vadd.f32 %v135, %v136
  %v138 = vsel %vm116, %v111, 0.0
  %v139 = vrot.slane %v138, 4
  %v140 = vadd.f32 %v138, %v139
  %v141 = vrot.slane %v140, 2
  %v142 = vadd.f32 %v140, %v141
  %v143 = vrot.slane %v142, 1
  %v144 = vadd.f32 %v142, %v143
  %v145 = vsel %vm116, %v112, 0.0
  %v146 = vrot.slane %v145, 4
  %v147 = vadd.f32 %v145, %v146
  %v148 = vrot.slane %v147, 2
  %v149 = vadd.f32 %v147, %v148
  %v150 = vrot.slane %v149, 1
  %v151 = vadd.f32 %v149, %v150
  %v152 = vsel %vm116, %v113, 0.0
  %v153 = vrot.slane %v152, 4
  %v154 = vadd.f32 %v152, %v153
  %v155 = vrot.slane %v154, 2
  %v156 = vadd.f32 %v154, %v155
  %v157 = vrot.slane %v156, 1
  %v158 = vadd.f32 %v156, %v157
  %v159 = vsel %vm116, %v114, 0.0
  %v160 = vrot.slane %v159, 4
  %v161 = vadd.f32 %v159, %v160
  %v162 = vrot.slane %v161, 2
  %v163 = vadd.f32 %v161, %v162
  %v164 = vrot.slane %v163, 1
  %v165 = vadd.f32 %v163, %v164
  %v166 = vsel %vm116, %v115, 0.0
  %v167 = vrot.slane %v166, 4
  %v168 = vadd.f32 %v166, %v167
  %v169 = vrot.slane %v168, 2
  %v170 = vadd.f32 %v168, %v169
  %v171 = vrot.slane %v170, 1
  %v172 = vadd.f32 %v170, %v171
  %v173 = vld [vmem:[%s2] sm:$0x1]
  %v175 = vlaneseq
  %v176 = vshrl.u32 %v175, 7
  %v177 = vsub.s32 0, %v176
  %v178 = vrot.slane %v173, %v177
  %v180 = vmul.f32 %v123, %v178
  %v181 = vmul.f32 %v130, %v178
  %v182 = vmul.f32 %v137, %v178
  %v183 = vmul.f32 %v144, %v178
  %v184 = vmul.f32 %v151, %v178
  %v185 = vmul.f32 %v158, %v178
  %v186 = vmul.f32 %v165, %v178
  %v187 = vmul.f32 %v172, %v178
  %v196 = vrot.slane %v181, 7
  %vm197 = vcmask 1041409
  %v198 = vsel %vm197, %v196, %v180
  %v199 = vrot.slane %v182, 6
  %vm200 = vcmask 1042434
  %v201 = vsel %vm200, %v199, %v198
  %v202 = vrot.slane %v183, 5
  %vm203 = vcmask 1043459
  %v204 = vsel %vm203, %v202, %v201
  %v205 = vrot.slane %v184, 4
  %vm206 = vcmask 1044484
  %v207 = vsel %vm206, %v205, %v204
  %v208 = vrot.slane %v185, 3
  %vm209 = vcmask 1045509
  %v210 = vsel %vm209, %v208, %v207
  %v211 = vrot.slane %v186, 2
  %vm212 = vcmask 1046534
  %v213 = vsel %vm212, %v211, %v210
  %v214 = vrot.slane %v187, 1
  %vm215 = vcmask 1047559
  %v216 = vsel %vm215, %v214, %v213
  %v218 = vsel %vm116, %v216, 0.0
  %219 = vadd.xlane.f32.xlu0 %v218
  %v220 = vpop.xlane.xlu0 %219
  %s221 = sld [smem:[#allocation2]]
  %v222 = vstv %s221
  %v223 = vadd.f32 %v220, %v222
  %vm224 = vcmask 7168
  %225 = vst.msk [vmem:[%s4] sm:$0xff] %vm224, %v223
  // Predicated region
  $region18: #{tpu_custom_call.1} parent=0 // pred_check
    _
  $region19: #{tpu_custom_call.1} parent=0 // pred_check_branch
    %227 = sbr.rel (0) target = $region21
  $region20: #{tpu_custom_call.1} parent=0 // pred_region
    _
  $region21: #{tpu_custom_call.1} parent=0 // pred_fallthru
    _
  // Predicated region
  $region22: #{tpu_custom_call.1} parent=0 // pred_check
    _
  $region23: #{tpu_custom_call.1} parent=0 // pred_check_branch
    %229 = sbr.rel (0) target = $region25
  $region24: #{tpu_custom_call.1} parent=0 // pred_region
    _
  $region25: #{tpu_custom_call.1} parent=0 // pred_fallthru
    _

</llo_original>
